<compile_context>
chip_gen: v5e
topology: v5e:2x2
jax: 0.10.0
libtpu: 0.0.40
codegen_flags: <defaults>
</compile_context>

<pallas_src>
import functools

import jax
import jax.numpy as jnp
from jax.experimental import pallas as pl
from jax.experimental.pallas import tpu as pltpu


def _round_up(x, m):
    return ((x + m - 1) // m) * m


def _mlp_kernel(x_ref, w1_ref, b1_ref, w2_ref, b2_ref, w3_ref, b3_ref, o_ref):
    # Transposed layout: x_ref is (F, TILE_N); batch sits on the lane axis.
    x = x_ref[...]
    # Layer 1: Linear + ReLU          (H, F) @ (F, TILE_N) -> (H, TILE_N)
    h1 = jnp.dot(w1_ref[...], x, preferred_element_type=jnp.float32) + b1_ref[...]
    h1 = jnp.maximum(h1, 0.0)
    # Layer 2: Linear + ReLU          (H, H) @ (H, TILE_N) -> (H, TILE_N)
    h2 = jnp.dot(w2_ref[...], h1, preferred_element_type=jnp.float32) + b2_ref[...]
    h2 = jnp.maximum(h2, 0.0)
    # Layer 3: Linear (logits)        (O, H) @ (H, TILE_N) -> (O, TILE_N)
    out = jnp.dot(w3_ref[...], h2, preferred_element_type=jnp.float32) + b3_ref[...]
    o_ref[...] = out.astype(o_ref.dtype)


@functools.partial(jax.jit, static_argnames=("tile_n",))
def moon_model_forward(x, params, tile_n=1024):
    """Forward pass of MoonModel.

    x:       (N, input_features) float32
    params:  dict with w1 (F,H), b1 (H,), w2 (H,H), b2 (H,), w3 (H,O), b3 (O,)
             (weights stored as (in, out), i.e. y = x @ W + b, equivalent to
             PyTorch's x @ W.T + b with W of shape (out, in))
    returns: (N, output_features) float32
    """
    w1, b1 = params["w1"], params["b1"]
    w2, b2 = params["w2"], params["b2"]
    w3, b3 = params["w3"], params["b3"]

    n, f = x.shape
    h = w1.shape[1]
    o = w3.shape[1]

    # Pick a lane-dim tile: multiple of 128, capped at `tile_n`, and never
    # larger than the (padded) batch.
    tn = min(tile_n, _round_up(n, 128))
    n_pad = _round_up(n, tn)

    # Transposed operands: batch on lanes, features/hidden on sublanes.
    xt = jnp.pad(x.T, ((0, 0), (0, n_pad - n)))          # (F, N_pad)
    w1t, w2t, w3t = w1.T, w2.T, w3.T                      # (H,F), (H,H), (O,H)
    b1c = b1.reshape(-1, 1)                               # (H, 1)
    b2c = b2.reshape(-1, 1)                               # (H, 1)
    b3c = b3.reshape(-1, 1)                               # (O, 1)

    resident = lambda a: pl.BlockSpec(a.shape, lambda i: (0, 0))

    out_t = pl.pallas_call(
        _mlp_kernel,
        out_shape=jax.ShapeDtypeStruct((o, n_pad), jnp.float32),
        grid=(n_pad // tn,),
        in_specs=[
            pl.BlockSpec((f, tn), lambda i: (0, i)),      # x tile, pipelined
            resident(w1t), resident(b1c),                  # weights stay in VMEM
            resident(w2t), resident(b2c),
            resident(w3t), resident(b3c),
        ],
        out_specs=pl.BlockSpec((o, tn), lambda i: (0, i)),
        compiler_params=pltpu.CompilerParams(
            dimension_semantics=("parallel",),
        ),
    )(xt, w1t, b1c, w2t, b2c, w3t, b3c)

    return out_t[:, :n].T                                  # (N, O)


def init_moon_model_params(key, input_features, output_features, hidden_units=8):
    """Deterministic init matching PyTorch nn.Linear default:
    U(-1/sqrt(fan_in), 1/sqrt(fan_in)) for both weights and biases."""
    keys = jax.random.split(key, 6)

    def linear_init(kw, kb, fan_in, fan_out):
        bound = 1.0 / jnp.sqrt(jnp.float32(fan_in))
        w = jax.random.uniform(kw, (fan_in, fan_out), jnp.float32, -bound, bound)
        b = jax.random.uniform(kb, (fan_out,), jnp.float32, -bound, bound)
        return w, b

    w1, b1 = linear_init(keys[0], keys[1], input_features, hidden_units)
    w2, b2 = linear_init(keys[2], keys[3], hidden_units, hidden_units)
    w3, b3 = linear_init(keys[4], keys[5], hidden_units, output_features)
    return {"w1": w1, "b1": b1, "w2": w2, "b2": b2, "w3": w3, "b3": b3}


def _reference_forward(x, p):
    h1 = jnp.maximum(x @ p["w1"] + p["b1"], 0.0)
    h2 = jnp.maximum(h1 @ p["w2"] + p["b2"], 0.0)
    return h2 @ p["w3"] + p["b3"]


if __name__ == "__main__":
    # Moons binary classification: 2 input features, 1 output logit, hidden=8.
    INPUT_FEATURES = 2
    OUTPUT_FEATURES = 1
    HIDDEN = 8
    BATCH = 300          # not a multiple of the tile -> exercises padding
    TILE_N = 128         # small tile for the demo so the grid has >1 step

    key = jax.random.PRNGKey(0)
    k_params, k_x = jax.random.split(key)

    params = init_moon_model_params(k_params, INPUT_FEATURES, OUTPUT_FEATURES, HIDDEN)
    x = jax.random.normal(k_x, (BATCH, INPUT_FEATURES), dtype=jnp.float32)

    out = moon_model_forward(x, params, tile_n=TILE_N)
    out = jax.block_until_ready(out)

    # Sanity-check against the pure-JAX reference.
    ref = jax.block_until_ready(_reference_forward(x, params))
    assert out.shape == (BATCH, OUTPUT_FEATURES)
    assert jnp.allclose(out, ref, atol=1e-5, rtol=1e-5), "mismatch vs reference"

    print("KERNEL_OK")
</pallas_src>

<mosaic_0001>
module attributes {stable_mosaic.version = 11 : i64} {
  func.func @_mlp_kernel(%arg0: i32, %arg1: memref<2x128xf32, #tpu.memory_space<vmem>>, %arg2: memref<8x2xf32, #tpu.memory_space<vmem>>, %arg3: memref<8x1xf32, #tpu.memory_space<vmem>>, %arg4: memref<8x8xf32, #tpu.memory_space<vmem>>, %arg5: memref<8x1xf32, #tpu.memory_space<vmem>>, %arg6: memref<1x8xf32, #tpu.memory_space<vmem>>, %arg7: memref<1x1xf32, #tpu.memory_space<vmem>>, %arg8: memref<1x128xf32, #tpu.memory_space<vmem>>) attributes {dimension_semantics = [#tpu.dimension_semantics<parallel>], iteration_bounds = array<i64: 3>, scalar_prefetch = 0 : i64, scratch_operands = 0 : i64, tpu.core_type = #tpu.core_type<tc>, window_params = [{transform_indices = @transform_0, window_bounds = array<i64: 2, 128>}, {pipeline_mode = #tpu.pipeline_mode<synchronous>, transform_indices = @transform_1, window_bounds = array<i64: 8, 2>}, {pipeline_mode = #tpu.pipeline_mode<synchronous>, transform_indices = @transform_2, window_bounds = array<i64: 8, 1>}, {pipeline_mode = #tpu.pipeline_mode<synchronous>, transform_indices = @transform_3, window_bounds = array<i64: 8, 8>}, {pipeline_mode = #tpu.pipeline_mode<synchronous>, transform_indices = @transform_4, window_bounds = array<i64: 8, 1>}, {pipeline_mode = #tpu.pipeline_mode<synchronous>, transform_indices = @transform_5, window_bounds = array<i64: 1, 8>}, {pipeline_mode = #tpu.pipeline_mode<synchronous>, transform_indices = @transform_6, window_bounds = array<i64: 1, 1>}, {transform_indices = @transform_7, window_bounds = array<i64: 1, 128>}]} {
    %c0 = arith.constant 0 : index
    %c0_0 = arith.constant 0 : index
    %0 = vector.load %arg1[%c0, %c0_0] : memref<2x128xf32, #tpu.memory_space<vmem>>, vector<2x128xf32>
    %c0_1 = arith.constant 0 : index
    %c0_2 = arith.constant 0 : index
    %1 = vector.load %arg2[%c0_1, %c0_2] : memref<8x2xf32, #tpu.memory_space<vmem>>, vector<8x2xf32>
    %cst = arith.constant dense<0.000000e+00> : vector<8x128xf32>
    %2 = tpu.matmul %1, %0, %cst {dimension_numbers = #tpu.dot_dimension_numbers<[1], [0], [0], [1], [0, 0, 1, 1], [], []>} : vector<8x2xf32>, vector<2x128xf32>, vector<8x128xf32> -> vector<8x128xf32>
    %c0_3 = arith.constant 0 : index
    %c0_4 = arith.constant 0 : index
    %3 = vector.load %arg3[%c0_3, %c0_4] : memref<8x1xf32, #tpu.memory_space<vmem>>, vector<8x1xf32>
    %4 = vector.broadcast %3 : vector<8x1xf32> to vector<8x128xf32>
    %5 = arith.addf %2, %4 : vector<8x128xf32>
    %cst_5 = arith.constant 0.000000e+00 : f32
    %6 = vector.broadcast %cst_5 : f32 to vector<8x128xf32>
    %7 = arith.maximumf %5, %6 : vector<8x128xf32>
    %c0_6 = arith.constant 0 : index
    %c0_7 = arith.constant 0 : index
    %8 = vector.load %arg4[%c0_6, %c0_7] : memref<8x8xf32, #tpu.memory_space<vmem>>, vector<8x8xf32>
    %cst_8 = arith.constant dense<0.000000e+00> : vector<8x128xf32>
    %9 = tpu.matmul %8, %7, %cst_8 {dimension_numbers = #tpu.dot_dimension_numbers<[1], [0], [0], [1], [0, 0, 1, 1], [], []>} : vector<8x8xf32>, vector<8x128xf32>, vector<8x128xf32> -> vector<8x128xf32>
    %c0_9 = arith.constant 0 : index
    %c0_10 = arith.constant 0 : index
    %10 = vector.load %arg5[%c0_9, %c0_10] : memref<8x1xf32, #tpu.memory_space<vmem>>, vector<8x1xf32>
    %11 = vector.broadcast %10 : vector<8x1xf32> to vector<8x128xf32>
    %12 = arith.addf %9, %11 : vector<8x128xf32>
    %cst_11 = arith.constant 0.000000e+00 : f32
    %13 = vector.broadcast %cst_11 : f32 to vector<8x128xf32>
    %14 = arith.maximumf %12, %13 : vector<8x128xf32>
    %c0_12 = arith.constant 0 : index
    %c0_13 = arith.constant 0 : index
    %15 = vector.load %arg6[%c0_12, %c0_13] : memref<1x8xf32, #tpu.memory_space<vmem>>, vector<1x8xf32>
    %cst_14 = arith.constant dense<0.000000e+00> : vector<1x128xf32>
    %16 = tpu.matmul %15, %14, %cst_14 {dimension_numbers = #tpu.dot_dimension_numbers<[1], [0], [0], [1], [0, 0, 1, 1], [], []>} : vector<1x8xf32>, vector<8x128xf32>, vector<1x128xf32> -> vector<1x128xf32>
    %c0_15 = arith.constant 0 : index
    %c0_16 = arith.constant 0 : index
    %17 = vector.load %arg7[%c0_15, %c0_16] : memref<1x1xf32, #tpu.memory_space<vmem>>, vector<1x1xf32>
    %18 = vector.broadcast %17 : vector<1x1xf32> to vector<1x128xf32>
    %19 = arith.addf %16, %18 : vector<1x128xf32>
    %c0_17 = arith.constant 0 : index
    %c0_18 = arith.constant 0 : index
    %20 = vector.load %arg8[%c0_17, %c0_18] : memref<1x128xf32, #tpu.memory_space<vmem>>, vector<1x128xf32>
    tpu.vector_store %arg8[%c0_17, %c0_18], %19 {strides = array<i32>} : memref<1x128xf32, #tpu.memory_space<vmem>>, vector<1x128xf32>,
    return
  }
  func.func @transform_0(%arg0: i32) -> (i32, i32) {
    %c0_i32 = arith.constant 0 : i32
    %c0_i32_0 = arith.constant 0 : i32
    return %c0_i32, %arg0 : i32, i32
  }
  func.func @transform_1(%arg0: i32) -> (i32, i32) {
    %c0_i32 = arith.constant 0 : i32
    %c0_i32_0 = arith.constant 0 : i32
    %c0_i32_1 = arith.constant 0 : i32
    return %c0_i32, %c0_i32_0 : i32, i32
  }
  func.func @transform_2(%arg0: i32) -> (i32, i32) {
    %c0_i32 = arith.constant 0 : i32
    %c0_i32_0 = arith.constant 0 : i32
    %c0_i32_1 = arith.constant 0 : i32
    return %c0_i32, %c0_i32_0 : i32, i32
  }
  func.func @transform_3(%arg0: i32) -> (i32, i32) {
    %c0_i32 = arith.constant 0 : i32
    %c0_i32_0 = arith.constant 0 : i32
    %c0_i32_1 = arith.constant 0 : i32
    return %c0_i32, %c0_i32_0 : i32, i32
  }
  func.func @transform_4(%arg0: i32) -> (i32, i32) {
    %c0_i32 = arith.constant 0 : i32
    %c0_i32_0 = arith.constant 0 : i32
    %c0_i32_1 = arith.constant 0 : i32
    return %c0_i32, %c0_i32_0 : i32, i32
  }
  func.func @transform_5(%arg0: i32) -> (i32, i32) {
    %c0_i32 = arith.constant 0 : i32
    %c0_i32_0 = arith.constant 0 : i32
    %c0_i32_1 = arith.constant 0 : i32
    return %c0_i32, %c0_i32_0 : i32, i32
  }
  func.func @transform_6(%arg0: i32) -> (i32, i32) {
    %c0_i32 = arith.constant 0 : i32
    %c0_i32_0 = arith.constant 0 : i32
    %c0_i32_1 = arith.constant 0 : i32
    return %c0_i32, %c0_i32_0 : i32, i32
  }
  func.func @transform_7(%arg0: i32) -> (i32, i32) {
    %c0_i32 = arith.constant 0 : i32
    %c0_i32_0 = arith.constant 0 : i32
    return %c0_i32, %arg0 : i32, i32
  }
}

</mosaic_0001>

<llo_original>
// kernel: moon_model_forward.1
$region0: #{moon_model_forward.1}
  #allocation0 [shape = 'u32[]', space=smem, size = 0x4, offset = 0x4, fixed_abs, tag = 'smem constant byte address 0x4 - core index']
  #allocation1 [shape = 'u32[72,128]{1,0:T(1,128)}', space=vmem, size = 0x9000, scoped, tag = 'internal scratch']
  #allocation2 [shape = 'f32[1,1]{1,0:T(1,128)S(1)}', space=vmem, size = 0x200, scoped, tag = 'scoped memory for moon_model_forward.1']
  %s0 = inlined_call_operand.vmem [shape: f32[2,384], index: 0, kind: input, shape index: {}]
  %s1 = inlined_call_operand.vmem [shape: f32[8,2], index: 1, kind: input, shape index: {}]
  %s2 = inlined_call_operand.vmem [shape: f32[8,1], index: 2, kind: input, shape index: {}]
  %s3 = inlined_call_operand.vmem [shape: f32[8,8], index: 3, kind: input, shape index: {}]
  %s4 = inlined_call_operand.vmem [shape: f32[8,1], index: 4, kind: input, shape index: {}]
  %s5 = inlined_call_operand.vmem [shape: f32[1,8], index: 5, kind: input, shape index: {}]
  %s6 = inlined_call_operand.<no memory space> [shape: f32[1,1], index: 6, kind: input, shape index: {}]
  %s7 = inlined_call_operand.vmem [shape: f32[1,384], index: 7, kind: output, shape index: {}]
  %s8 = sld [smem:[#allocation0]]
  $region61: #{moon_model_forward.1} parent=0
    _
  %s10 = ssub.s32 1, %s8
  %s11 = scalar_select 0, %s10, %s8
  %v12 = vstv %s6
  %13 = vst [vmem:[#allocation2] sm:$0x1] %v12
  loop: start=0, step=1, limit=5
  $region2: #{moon_model_forward.1} parent=0 // loop_pre_header
    _
  $region3: #{moon_model_forward.1} parent=0 // loop_header
    %s15 = sphi 0, %s19
    %p16 = scmp.ge.s32.totalorder %s15, 5
    %s25 = sphi 0, %s27
    %s28 = sphi 0, %s25
    %s29 = sphi 0, %s28
    %s45 = sphi 0, %s29
    %s49 = sphi 0, %s49
    %s51 = sphi 0, %s49
    %s52 = sphi 0, %s51
    %s66 = sphi 0, %s52
    %s70 = sphi 0, %s70
    %s72 = sphi 0, %s70
    %s73 = sphi 0, %s72
    %s87 = sphi 0, %s73
    %s91 = sphi 0, %s91
    %s93 = sphi 0, %s91
    %s94 = sphi 0, %s93
    %s108 = sphi 0, %s94
    %s112 = sphi 0, %s112
    %s114 = sphi 0, %s112
    %s115 = sphi 0, %s114
    %s129 = sphi 0, %s115
    %s133 = sphi 0, %s133
    %s135 = sphi 0, %s133
    %s136 = sphi 0, %s135
    %s150 = sphi 0, %s136
    %s154 = sphi 0, %s154
    %s156 = sphi 0, %s154
    %s157 = sphi 0, %s156
    %s171 = sphi 0, %s157
    %s177 = sphi 0, %s179
    %s180 = sphi 0, %s177
    %s181 = sphi 0, %s180
    %s197 = sphi 0, %s181
  $region4: #{moon_model_forward.1} parent=0 // loop_header_branch
    %18 = sbr.rel (%p16) target = $region8
  $region5: #{moon_model_forward.1} parent=0 // loop_body
    %s20 = ssub.s32 %s15, 1
    %s21 = ssub.s32 %s15, 2
    %s22 = sadd.s32 %s15, 1
    %s23 = ssub.s32 %s15, %s22
    %p24 = scmp.eq.s32.totalorder %s23, 0
    %s26 = sadd.s32 %s25, 1
    %s27 = scalar_select %p24, %s25, %s26
    %p30 = pneg %p24
    %p31 = scmp.eq.s32.totalorder %s15, 2
    %p32 = por %p30, %p31
    %p33 = scmp.ne.s32.totalorder %s25, %s28
    %p34 = scmp.eq.s32.totalorder %s15, 0
    %p35 = por %p33, %p34
    %p36 = scmp.ne.s32.totalorder %s25, %s28
    %p37 = scmp.eq.s32.totalorder %s20, 2
    %p38 = por %p36, %p37
    %p39 = scmp.ne.s32.totalorder %s28, %s29
    %p40 = scmp.eq.s32.totalorder %s20, 0
    %p41 = por %p39, %p40
    %p42 = scmp.ne.s32.totalorder %s28, %s29
    %p43 = scmp.eq.s32.totalorder %s21, 2
    %p44 = por %p42, %p43
    %p46 = scmp.ne.s32.totalorder %s29, %s45
    %p47 = scmp.eq.s32.totalorder %s21, 0
    %p48 = por %p46, %p47
    %s50 = sadd.s32 %s49, 1
    %p53 = scmp.eq.s32.totalorder %s15, 2
    %p54 = scmp.ne.s32.totalorder %s49, %s51
    %p55 = scmp.eq.s32.totalorder %s15, 0
    %p56 = por %p54, %p55
    %p57 = scmp.ne.s32.totalorder %s49, %s51
    %p58 = scmp.eq.s32.totalorder %s20, 2
    %p59 = por %p57, %p58
    %p60 = scmp.ne.s32.totalorder %s51, %s52
    %p61 = scmp.eq.s32.totalorder %s20, 0
    %p62 = por %p60, %p61
    %p63 = scmp.ne.s32.totalorder %s51, %s52
    %p64 = scmp.eq.s32.totalorder %s21, 2
    %p65 = por %p63, %p64
    %p67 = scmp.ne.s32.totalorder %s52, %s66
    %p68 = scmp.eq.s32.totalorder %s21, 0
    %p69 = por %p67, %p68
    %s71 = sadd.s32 %s70, 1
    %p74 = scmp.eq.s32.totalorder %s15, 2
    %p75 = scmp.ne.s32.totalorder %s70, %s72
    %p76 = scmp.eq.s32.totalorder %s15, 0
    %p77 = por %p75, %p76
    %p78 = scmp.ne.s32.totalorder %s70, %s72
    %p79 = scmp.eq.s32.totalorder %s20, 2
    %p80 = por %p78, %p79
    %p81 = scmp.ne.s32.totalorder %s72, %s73
    %p82 = scmp.eq.s32.totalorder %s20, 0
    %p83 = por %p81, %p82
    %p84 = scmp.ne.s32.totalorder %s72, %s73
    %p85 = scmp.eq.s32.totalorder %s21, 2
    %p86 = por %p84, %p85
    %p88 = scmp.ne.s32.totalorder %s73, %s87
    %p89 = scmp.eq.s32.totalorder %s21, 0
    %p90 = por %p88, %p89
    %s92 = sadd.s32 %s91, 1
    %p95 = scmp.eq.s32.totalorder %s15, 2
    %p96 = scmp.ne.s32.totalorder %s91, %s93
    %p97 = scmp.eq.s32.totalorder %s15, 0
    %p98 = por %p96, %p97
    %p99 = scmp.ne.s32.totalorder %s91, %s93
    %p100 = scmp.eq.s32.totalorder %s20, 2
    %p101 = por %p99, %p100
    %p102 = scmp.ne.s32.totalorder %s93, %s94
    %p103 = scmp.eq.s32.totalorder %s20, 0
    %p104 = por %p102, %p103
    %p105 = scmp.ne.s32.totalorder %s93, %s94
    %p106 = scmp.eq.s32.totalorder %s21, 2
    %p107 = por %p105, %p106
    %p109 = scmp.ne.s32.totalorder %s94, %s108
    %p110 = scmp.eq.s32.totalorder %s21, 0
    %p111 = por %p109, %p110
    %s113 = sadd.s32 %s112, 1
    %p116 = scmp.eq.s32.totalorder %s15, 2
    %p117 = scmp.ne.s32.totalorder %s112, %s114
    %p118 = scmp.eq.s32.totalorder %s15, 0
    %p119 = por %p117, %p118
    %p120 = scmp.ne.s32.totalorder %s112, %s114
    %p121 = scmp.eq.s32.totalorder %s20, 2
    %p122 = por %p120, %p121
    %p123 = scmp.ne.s32.totalorder %s114, %s115
    %p124 = scmp.eq.s32.totalorder %s20, 0
    %p125 = por %p123, %p124
    %p126 = scmp.ne.s32.totalorder %s114, %s115
    %p127 = scmp.eq.s32.totalorder %s21, 2
    %p128 = por %p126, %p127
    %p130 = scmp.ne.s32.totalorder %s115, %s129
    %p131 = scmp.eq.s32.totalorder %s21, 0
    %p132 = por %p130, %p131
    %s134 = sadd.s32 %s133, 1
    %p137 = scmp.eq.s32.totalorder %s15, 2
    %p138 = scmp.ne.s32.totalorder %s133, %s135
    %p139 = scmp.eq.s32.totalorder %s15, 0
    %p140 = por %p138, %p139
    %p141 = scmp.ne.s32.totalorder %s133, %s135
    %p142 = scmp.eq.s32.totalorder %s20, 2
    %p143 = por %p141, %p142
    %p144 = scmp.ne.s32.totalorder %s135, %s136
    %p145 = scmp.eq.s32.totalorder %s20, 0
    %p146 = por %p144, %p145
    %p147 = scmp.ne.s32.totalorder %s135, %s136
    %p148 = scmp.eq.s32.totalorder %s21, 2
    %p149 = por %p147, %p148
    %p151 = scmp.ne.s32.totalorder %s136, %s150
    %p152 = scmp.eq.s32.totalorder %s21, 0
    %p153 = por %p151, %p152
    %s155 = sadd.s32 %s154, 1
    %p158 = scmp.eq.s32.totalorder %s15, 2
    %p159 = scmp.ne.s32.totalorder %s154, %s156
    %p160 = scmp.eq.s32.totalorder %s15, 0
    %p161 = por %p159, %p160
    %p162 = scmp.ne.s32.totalorder %s154, %s156
    %p163 = scmp.eq.s32.totalorder %s20, 2
    %p164 = por %p162, %p163
    %p165 = scmp.ne.s32.totalorder %s156, %s157
    %p166 = scmp.eq.s32.totalorder %s20, 0
    %p167 = por %p165, %p166
    %p168 = scmp.ne.s32.totalorder %s156, %s157
    %p169 = scmp.eq.s32.totalorder %s21, 2
    %p170 = por %p168, %p169
    %p172 = scmp.ne.s32.totalorder %s157, %s171
    %p173 = scmp.eq.s32.totalorder %s21, 0
    %p174 = por %p172, %p173
    %s175 = ssub.s32 %s15, %s22
    %p176 = scmp.eq.s32.totalorder %s175, 0
    %s178 = sadd.s32 %s177, 1
    %s179 = scalar_select %p176, %s177, %s178
    %p182 = pneg %p176
    %p183 = scmp.eq.s32.totalorder %s15, 2
    %p184 = por %p182, %p183
    %p185 = scmp.ne.s32.totalorder %s177, %s180
    %p186 = scmp.eq.s32.totalorder %s15, 0
    %p187 = por %p185, %p186
    %p188 = scmp.ne.s32.totalorder %s177, %s180
    %p189 = scmp.eq.s32.totalorder %s20, 2
    %p190 = por %p188, %p189
    %p191 = scmp.ne.s32.totalorder %s180, %s181
    %p192 = scmp.eq.s32.totalorder %s20, 0
    %p193 = por %p191, %p192
    %p194 = scmp.ne.s32.totalorder %s180, %s181
    %p195 = scmp.eq.s32.totalorder %s21, 2
    %p196 = por %p194, %p195
    %p198 = scmp.ne.s32.totalorder %s181, %s197
    %p199 = scmp.eq.s32.totalorder %s21, 0
    %p200 = por %p198, %p199
    %p201 = scmp.le.s32.totalorder 1, %s15
    %p202 = scmp.lt.s32.totalorder %s15, 4
    %p203 = pnand %p201, %p202
    %p204 = pneg %p203
    // Predicated region
    $region9: #{moon_model_forward.1} parent=5 // pred_check
      _
    $region10: #{moon_model_forward.1} parent=5 // pred_check_branch
      %206 = sbr.rel (%p203) target = $region12
    $region11: #{moon_model_forward.1} parent=5 // pred_region
      %s207 = ssub.s32 %s15, 1
      // Predicated region
      $region13: #{moon_model_forward.1} parent=11 // pred_check
        %p208 = pneg %p62
      $region14: #{moon_model_forward.1} parent=11 // pred_check_branch
        %210 = sbr.rel (%p208) target = $region16
      $region15: #{moon_model_forward.1} parent=11 // pred_region
        _
      $region16: #{moon_model_forward.1} parent=11 // pred_fallthru
        _
      // Predicated region
      $region17: #{moon_model_forward.1} parent=11 // pred_check
        %p211 = pneg %p83
      $region18: #{moon_model_forward.1} parent=11 // pred_check_branch
        %213 = sbr.rel (%p211) target = $region20
      $region19: #{moon_model_forward.1} parent=11 // pred_region
        _
      $region20: #{moon_model_forward.1} parent=11 // pred_fallthru
        _
      // Predicated region
      $region21: #{moon_model_forward.1} parent=11 // pred_check
        %p214 = pneg %p104
      $region22: #{moon_model_forward.1} parent=11 // pred_check_branch
        %216 = sbr.rel (%p214) target = $region24
      $region23: #{moon_model_forward.1} parent=11 // pred_region
        _
      $region24: #{moon_model_forward.1} parent=11 // pred_fallthru
        _
      // Predicated region
      $region25: #{moon_model_forward.1} parent=11 // pred_check
        %p217 = pneg %p125
      $region26: #{moon_model_forward.1} parent=11 // pred_check_branch
        %219 = sbr.rel (%p217) target = $region28
      $region27: #{moon_model_forward.1} parent=11 // pred_region
        _
      $region28: #{moon_model_forward.1} parent=11 // pred_fallthru
        _
      // Predicated region
      $region29: #{moon_model_forward.1} parent=11 // pred_check
        %p220 = pneg %p146
      $region30: #{moon_model_forward.1} parent=11 // pred_check_branch
        %222 = sbr.rel (%p220) target = $region32
      $region31: #{moon_model_forward.1} parent=11 // pred_region
        _
      $region32: #{moon_model_forward.1} parent=11 // pred_fallthru
        _
      // Predicated region
      $region33: #{moon_model_forward.1} parent=11 // pred_check
        %p223 = pneg %p167
      $region34: #{moon_model_forward.1} parent=11 // pred_check_branch
        %225 = sbr.rel (%p223) target = $region36
      $region35: #{moon_model_forward.1} parent=11 // pred_region
        _
      $region36: #{moon_model_forward.1} parent=11 // pred_fallthru
        _
    $region12: #{moon_model_forward.1} parent=5 // pred_fallthru
      _
    %p226 = scmp.lt.s32.totalorder %s15, 3
    // Predicated region
    $region37: #{moon_model_forward.1} parent=5 // pred_check
      %p227 = pneg %p226
    $region38: #{moon_model_forward.1} parent=5 // pred_check_branch
      %229 = sbr.rel (%p227) target = $region40
    $region39: #{moon_model_forward.1} parent=5 // pred_region
      // Predicated region
      $region41: #{moon_model_forward.1} parent=39 // pred_check
        %p230 = pneg %p35
      $region42: #{moon_model_forward.1} parent=39 // pred_check_branch
        %232 = sbr.rel (%p230) target = $region44
      $region43: #{moon_model_forward.1} parent=39 // pred_region
        %p233 = scmp.lt.s32.totalorder %s15, 2
        %s234 = scalar_select %p233, %s15, 2
        %s235 = smul.addr %s234, 2
        %s236 = scalar_lea.vmem %s0, %s235
      $region44: #{moon_model_forward.1} parent=39 // pred_fallthru
        _
    $region40: #{moon_model_forward.1} parent=5 // pred_fallthru
      _
    %p237 = scmp.le.s32.totalorder 1, %s15
    %p238 = scmp.lt.s32.totalorder %s15, 4
    %p239 = pnand %p237, %p238
    %p240 = pneg %p239
    // Predicated region
    $region45: #{moon_model_forward.1} parent=5 // pred_check
      _
    $region46: #{moon_model_forward.1} parent=5 // pred_check_branch
      %242 = sbr.rel (%p239) target = $region48
    $region47: #{moon_model_forward.1} parent=5 // pred_region
      %s243 = ssub.s32 %s15, 1
      %p244 = scmp.lt.s32.totalorder %s20, 2
      %s245 = scalar_select %p244, %s20, 2
      %s246 = smul.addr %s245, 2
      %s247 = scalar_lea.vmem %s0, %s246
      %p248 = pneg %p41
      %p249 = pneg %p38
      %p250 = pneg %p62
      %p251 = pneg %p59
      %p252 = pneg %p83
      %p253 = pneg %p80
      %p254 = pneg %p104
      %p255 = pneg %p101
      %p256 = pneg %p125
      %p257 = pneg %p122
      %p258 = pneg %p146
      %p259 = pneg %p143
      %p260 = pneg %p167
      %p261 = pneg %p164
      %p262 = pneg %p193
      %p263 = pneg %p190
      %p264 = scmp.lt.s32.totalorder %s20, 2
      %s265 = scalar_select %p264, %s20, 2
      %s266 = scalar_lea.vmem %s7, %s265
      %p267 = scmp.lt.s32.totalorder %s20, 2
      %s268 = scalar_select %p267, %s20, 2
      %s269 = smul.addr %s268, 2
      %s270 = scalar_lea.vmem %s0, %s269
      %p271 = scmp.lt.s32.totalorder %s20, 2
      %s272 = scalar_select %p271, %s20, 2
      %s273 = scalar_lea.vmem %s7, %s272
      %v274 = vld [vmem:[%s270] sm:$0x3]
      %v275 = vld [vmem:[%s1] sm:$0xff]
      %v276 = vld [vmem:[%s2] sm:$0xff]
      %278 = vset.pattern.permute.xlu0 0
      %279 = vperm.xlu0 %278, %v276
      %v280 = vpop.permute.xlu0 %279
      %vm282 = vcmask 15360
      %v284 = vsel %vm282, %v275, 0
      %vm286 = vcmask 1041408
      %v288 = vsel %vm286, %v274, 0
      %290 = vmatpush.msra.mxu0 0.0
      %291 = vmatpush.msra.mxu0 0.0
      %292 = vmatpush.msra.mxu0 0.0
      %293 = vmatpush.msra.mxu0 0.0
      %294 = vmatpush.msra.mxu0 0.0
      %295 = vmatpush.msra.mxu0 0.0
      %296 = vmatpush.msra.mxu0 0.0
      %297 = vmatpush.msra.mxu0 0.0
      %298 = vmatpush.msra.mxu0 0.0
      %299 = vmatpush.msra.mxu0 0.0
      %300 = vmatpush.msra.mxu0 0.0
      %301 = vmatpush.msra.mxu0 0.0
      %302 = vmatpush.msra.mxu0 0.0
      %303 = vmatpush.msra.mxu0 0.0
      %304 = vmatpush.msra.mxu0 0.0
      %305 = vmatpush.msra.mxu0 %v288
      %306 = vmatmul.f32.gmra.mxu0 %v284
      %v307 = vpop.f32.mrf.mxu0
      %v308 = vadd.f32 %v280, %v307
      %309 = vdwg.mxu0
      %v310 = vmax.f32 %v308, 0.0
      %v311 = vld [vmem:[%s3] sm:$0xff]
      %v312 = vld [vmem:[%s4] sm:$0xff]
      %314 = vset.pattern.permute.xlu0 0
      %315 = vperm.xlu0 %314, %v312
      %v316 = vpop.permute.xlu0 %315
      %vm318 = vcmask 64512
      %v320 = vsel %vm318, %v311, 0
      %322 = vmatpush.msra.mxu0 0.0
      %323 = vmatpush.msra.mxu0 0.0
      %324 = vmatpush.msra.mxu0 0.0
      %325 = vmatpush.msra.mxu0 0.0
      %326 = vmatpush.msra.mxu0 0.0
      %327 = vmatpush.msra.mxu0 0.0
      %328 = vmatpush.msra.mxu0 0.0
      %329 = vmatpush.msra.mxu0 0.0
      %330 = vmatpush.msra.mxu0 0.0
      %331 = vmatpush.msra.mxu0 0.0
      %332 = vmatpush.msra.mxu0 0.0
      %333 = vmatpush.msra.mxu0 0.0
      %334 = vmatpush.msra.mxu0 0.0
      %335 = vmatpush.msra.mxu0 0.0
      %336 = vmatpush.msra.mxu0 0.0
      %337 = vmatpush.msra.mxu0 %v310
      %338 = vmatmul.f32.gmra.mxu0 %v320
      %v339 = vpop.f32.mrf.mxu0
      %v340 = vadd.f32 %v316, %v339
      %341 = vdwg.mxu0
      %v342 = vmax.f32 %v340, 0.0
      %v343 = vld [vmem:[%s5] sm:$0x1]
      %v344 = vld [vmem:[#allocation2] sm:$0x1]
      %346 = vset.pattern.permute.xlu0 0
      %347 = vperm.xlu0 %346, %v344
      %v348 = vpop.permute.xlu0 %347
      %v350 = vperm.slane %v348, 0
      %v352 = vsel %vm318, %v343, 0
      %354 = vmatpush.msra.mxu0 0.0
      %355 = vmatpush.msra.mxu0 0.0
      %356 = vmatpush.msra.mxu0 0.0
      %357 = vmatpush.msra.mxu0 0.0
      %358 = vmatpush.msra.mxu0 0.0
      %359 = vmatpush.msra.mxu0 0.0
      %360 = vmatpush.msra.mxu0 0.0
      %361 = vmatpush.msra.mxu0 0.0
      %362 = vmatpush.msra.mxu0 0.0
      %363 = vmatpush.msra.mxu0 0.0
      %364 = vmatpush.msra.mxu0 0.0
      %365 = vmatpush.msra.mxu0 0.0
      %366 = vmatpush.msra.mxu0 0.0
      %367 = vmatpush.msra.mxu0 0.0
      %368 = vmatpush.msra.mxu0 0.0
      %369 = vmatpush.msra.mxu0 %v342
      %370 = vmatmul.f32.gmra.mxu0 %v352
      %v371 = vpop.f32.mrf.mxu0
      %v372 = vadd.f32 %v350, %v371
      %373 = vdwg.mxu0
      %374 = vst [vmem:[%s273] sm:$0x1] %v372
      %p375 = scmp.lt.s32.totalorder %s20, 2
      %s376 = scalar_select %p375, %s20, 2
      %s377 = scalar_lea.vmem %s7, %s376
      // Predicated region
      $region49: #{moon_model_forward.1} parent=47 // pred_check
        %p378 = pneg %p190
      $region50: #{moon_model_forward.1} parent=47 // pred_check_branch
        %380 = sbr.rel (%p378) target = $region52
      $region51: #{moon_model_forward.1} parent=47 // pred_region
        _
      $region52: #{moon_model_forward.1} parent=47 // pred_fallthru
        _
    $region48: #{moon_model_forward.1} parent=5 // pred_fallthru
      _
    %p381 = scmp.le.s32.totalorder 2, %s15
    // Predicated region
    $region53: #{moon_model_forward.1} parent=5 // pred_check
      %p382 = pneg %p381
    $region54: #{moon_model_forward.1} parent=5 // pred_check_branch
      %384 = sbr.rel (%p382) target = $region56
    $region55: #{moon_model_forward.1} parent=5 // pred_region
      %s385 = ssub.s32 %s15, 2
      // Predicated region
      $region57: #{moon_model_forward.1} parent=55 // pred_check
        %p386 = pneg %p196
      $region58: #{moon_model_forward.1} parent=55 // pred_check_branch
        %388 = sbr.rel (%p386) target = $region60
      $region59: #{moon_model_forward.1} parent=55 // pred_region
        %p389 = scmp.lt.s32.totalorder %s21, 2
        %s390 = scalar_select %p389, %s21, 2
        %s391 = scalar_lea.vmem %s7, %s390
      $region60: #{moon_model_forward.1} parent=55 // pred_fallthru
        _
    $region56: #{moon_model_forward.1} parent=5 // pred_fallthru
      _
  $region6: #{moon_model_forward.1} parent=0 // loop_footer
    %s19 = sadd.s32 1, %s15
  $region7: #{moon_model_forward.1} parent=0 // loop_footer_branch
    %14 = sbr.rel target = $region3
  $region8: #{moon_model_forward.1} parent=0 // loop_exit
    _

</llo_original>
